<compile_context>
chip_gen: v5e
topology: v5e:2x2
jax: 0.10.0
libtpu: 0.0.40
codegen_flags: <defaults>
</compile_context>

<pallas_src>
import functools

import jax
import jax.numpy as jnp
import numpy as np
from jax.experimental import pallas as pl
from jax.experimental.pallas import tpu as pltpu


def _round_up(x, m):
    return (x + m - 1) // m * m


def _nse_stats_kernel(p_ref, t_ref, cnt_ref, st_ref, st2_ref, se_ref,
                      *, T, G, TT, K):
    """Accumulate per-lane masked moments: cnt, sum(t), sum(t^2), sum((t-p)^2)."""
    g_idx = pl.program_id(0)
    t_idx = pl.program_id(1)

    @pl.when(t_idx == 0)
    def _init():
        cnt_ref[...] = jnp.zeros_like(cnt_ref)
        st_ref[...] = jnp.zeros_like(st_ref)
        st2_ref[...] = jnp.zeros_like(st2_ref)
        se_ref[...] = jnp.zeros_like(se_ref)

    p = p_ref[...].astype(jnp.float32)
    t = t_ref[...].astype(jnp.float32)
    L = p.shape[1]                                    # block lane width

    # In-bounds masks for the ragged edges (no wrapper padding of the inputs).
    rows = jax.lax.broadcasted_iota(jnp.int32, (TT, 1), 0) + t_idx * TT
    lanes = jax.lax.broadcasted_iota(jnp.int32, (1, L), 1)
    if K == 1:
        # Plain layout: row = time, global column = g_idx*L + lane.
        in_bounds = (rows < T) & ((lanes + g_idx * L) < G)
    else:
        # Folded layout: row rr holds times [rr*K, rr*K + K); lane l -> offset l//G.
        full_rows = T // K
        rem = T % K
        in_bounds = rows < full_rows
        if rem:
            in_bounds = in_bounds | ((rows == full_rows) & (lanes < rem * G))

    mask = in_bounds & (t == t)                       # in-bounds AND target not NaN
    ns = TT // 8

    def strips(x):                                    # (TT, L) -> (8, L) VPU strip-add
        if ns == 1:
            return x
        return jnp.sum(x.reshape(ns, 8, L), axis=0)

    maskf = mask.astype(jnp.float32)
    cnt_ref[...] += strips(maskf)
    t_z = jnp.where(mask, t, 0.0)
    st_ref[...] += strips(t_z)
    st2_ref[...] += strips(t_z * t_z)
    err = jnp.where(mask, t - p, 0.0)                 # select (not multiply): OOB garbage safe
    se_ref[...] += strips(err * err)


def nse_loss_test(output: jax.Array, target: jax.Array,
                  *, tt_max: int = 1024, tg_max: int = 512) -> jax.Array:
    """Pallas equivalent of NSELosstest.forward.  output/target: [T, Ngage, 1]."""
    assert output.shape == target.shape and output.ndim == 3 and output.shape[-1] == 1
    T, G, _ = output.shape

    p2d = output[:, :, 0]
    t2d = target[:, :, 0]
    if not jnp.issubdtype(t2d.dtype, jnp.floating):
        p2d = p2d.astype(jnp.float32)
        t2d = t2d.astype(jnp.float32)

    # ---- layout selection -------------------------------------------------------
    # Small-G: fold K consecutive time steps into the lane axis (free reshape of the
    # contiguous [T, G] layout) so lanes are dense instead of ~(128-G)/128 padding.
    K = (128 // G) if (0 < G <= 64) else 1
    if K > 1:
        rows = -(-T // K)
        t_fold = rows * K
        if t_fold != T:
            # At most K-1 extra rows of an already-small (G <= 64) array; the in-kernel
            # time-bounds mask excludes them, so the pad value is irrelevant.
            p2d = jnp.pad(p2d, ((0, t_fold - T), (0, 0)))
            t2d = jnp.pad(t2d, ((0, t_fold - T), (0, 0)))
        lanes_total = K * G
        p2d = p2d.reshape(rows, lanes_total)
        t2d = t2d.reshape(rows, lanes_total)
        TG = lanes_total                               # single lane block, full width
    else:
        rows = T
        lanes_total = G
        tg_max = max(128, (tg_max // 128) * 128)
        g_pad = _round_up(G, 128)
        if g_pad <= tg_max:
            # Aim for >= 2 gauge tiles so both v7x TensorCores get work.
            TG = max(128, _round_up(g_pad // 2, 128))
        else:
            TG = tg_max

    tt_max = max(8, (tt_max // 8) * 8)
    TT = min(tt_max, _round_up(rows, 8))
    n_t = pl.cdiv(rows, TT)
    n_g = pl.cdiv(lanes_total, TG)

    itemsize = jnp.dtype(p2d.dtype).itemsize
    # Double-buffered inputs + generous budget for in-kernel f32 intermediates.
    vmem_bytes = 4 * TT * TG * itemsize + 10 * TT * TG * 4 + (8 << 20)
    vmem_limit = int(min(64 << 20, max(32 << 20, vmem_bytes)))

    in_spec = pl.BlockSpec((TT, TG), lambda g, t: (t, g))
    stat_spec = pl.BlockSpec((8, TG), lambda g, t: (0, g))    # resident across t
    out_sds = jax.ShapeDtypeStruct((8, lanes_total), jnp.float32)

    kernel = functools.partial(_nse_stats_kernel, T=T, G=G, TT=TT, K=K)

    cnt, st, st2, se = pl.pallas_call(
        kernel,
        out_shape=(out_sds, out_sds, out_sds, out_sds),
        grid=(n_g, n_t),                                       # gauges outer, time inner
        in_specs=[in_spec, in_spec],
        out_specs=(stat_spec, stat_spec, stat_spec, stat_spec),
        compiler_params=pltpu.CompilerParams(
            dimension_semantics=("parallel", "arbitrary"),
            vmem_limit_bytes=vmem_limit),
        cost_estimate=pl.CostEstimate(
            flops=int(10 * rows * lanes_total),
            transcendentals=0,
            bytes_accessed=int(2 * rows * lanes_total * itemsize
                               + 4 * 8 * lanes_total * 4)),
    )(p2d, t2d)

    # ---- tiny O(G) epilogue in plain JAX ------------------------------------------
    cnt = jnp.sum(cnt, axis=0)
    st = jnp.sum(st, axis=0)
    st2 = jnp.sum(st2, axis=0)
    se = jnp.sum(se, axis=0)
    if K > 1:                                          # combine the K folded lane replicas
        cnt = jnp.sum(cnt.reshape(K, G), axis=0)
        st = jnp.sum(st.reshape(K, G), axis=0)
        st2 = jnp.sum(st2.reshape(K, G), axis=0)
        se = jnp.sum(se.reshape(K, G), axis=0)

    valid = cnt > 0.0
    safe_cnt = jnp.where(valid, cnt, 1.0)
    sst = jnp.maximum(st2 - st * st / safe_cnt, 0.0)   # guard tiny negatives
    temp = se / (jnp.sqrt(sst) + 0.1) ** 2
    losssum = jnp.sum(jnp.where(valid, temp, 0.0))
    nsample = jnp.sum(valid.astype(jnp.float32))
    return losssum / nsample


def _reference_numpy(output, target):
    """Direct port of the PyTorch loop for validation (float64 accumulation)."""
    out = np.asarray(output, dtype=np.float64)
    tgt = np.asarray(target, dtype=np.float64)
    Ngage = tgt.shape[1]
    losssum, nsample = 0.0, 0
    for ii in range(Ngage):
        p0 = out[:, ii, 0]
        t0 = tgt[:, ii, 0]
        mask = t0 == t0
        if mask.sum() > 0:
            p = p0[mask]
            t = t0[mask]
            tmean = t.mean()
            sst = np.sum((t - tmean) ** 2)
            ssres = np.sum((t - p) ** 2)
            losssum += ssres / (np.sqrt(sst) + 0.1) ** 2
            nsample += 1
    return losssum / nsample


if __name__ == "__main__":
    key = jax.random.PRNGKey(0)
    k1, k2, k3, k4, k5, k6 = jax.random.split(key, 6)

    # --- Test 1: small G -> folded lane layout (K=12, L=120), single tile. ---------
    T, G = 24, 10
    output = jax.random.normal(k1, (T, G, 1), dtype=jnp.float32)
    target = jax.random.normal(k2, (T, G, 1), dtype=jnp.float32)
    tgt_np = np.array(target)
    tgt_np[::5, 1, 0] = np.nan           # gauge 1: some missing samples
    tgt_np[:, 3, 0] = np.nan             # gauge 3: all missing -> skipped entirely
    tgt_np[2:7, 7, 0] = np.nan           # gauge 7: missing block
    target = jnp.asarray(tgt_np)
    loss = nse_loss_test(output, target)
    jax.block_until_ready(loss)
    np.testing.assert_allclose(np.asarray(loss), _reference_numpy(output, target),
                               rtol=1e-4, atol=1e-6)

    # --- Test 2: non-folded path, ragged multi-tile grid on both axes. -------------
    T2, G2 = 37, 150                      # TT=16 -> 3 time tiles; TG=128 -> 2 gauge tiles
    output2 = jax.random.normal(k3, (T2, G2, 1), dtype=jnp.float32)
    target2 = jax.random.normal(k4, (T2, G2, 1), dtype=jnp.float32)
    tgt2_np = np.array(target2)
    tgt2_np[::3, 5, 0] = np.nan
    tgt2_np[:, 100, 0] = np.nan           # all-NaN gauge -> skipped
    tgt2_np[10:20, 149, 0] = np.nan
    target2 = jnp.asarray(tgt2_np)
    loss2 = nse_loss_test(output2, target2, tt_max=16, tg_max=128)
    jax.block_until_ready(loss2)
    np.testing.assert_allclose(np.asarray(loss2), _reference_numpy(output2, target2),
                               rtol=1e-4, atol=1e-6)

    # --- Test 3: folded path with T % K != 0 (partial folded row) + 2 time tiles. --
    T3, G3 = 263, 5                       # K=25, L=125, rows=11, TT=8 -> 2 time tiles
    output3 = jax.random.normal(k5, (T3, G3, 1), dtype=jnp.float32)
    target3 = jax.random.normal(k6, (T3, G3, 1), dtype=jnp.float32)
    tgt3_np = np.array(target3)
    tgt3_np[::7, 0, 0] = np.nan
    tgt3_np[:, 2, 0] = np.nan             # all-NaN gauge -> skipped
    tgt3_np[20:40, 4, 0] = np.nan
    target3 = jnp.asarray(tgt3_np)
    loss3 = nse_loss_test(output3, target3, tt_max=8)
    jax.block_until_ready(loss3)
    np.testing.assert_allclose(np.asarray(loss3), _reference_numpy(output3, target3),
                               rtol=1e-4, atol=1e-6)

    print("KERNEL_OK")
</pallas_src>

<mosaic_0001>
module attributes {stable_mosaic.version = 11 : i64} {
  func.func @_nse_stats_kernel(%arg0: i32, %arg1: i32, %arg2: memref<8x120xf32, #tpu.memory_space<vmem>>, %arg3: memref<8x120xf32, #tpu.memory_space<vmem>>, %arg4: memref<8x120xf32, #tpu.memory_space<vmem>>, %arg5: memref<8x120xf32, #tpu.memory_space<vmem>>, %arg6: memref<8x120xf32, #tpu.memory_space<vmem>>, %arg7: memref<8x120xf32, #tpu.memory_space<vmem>>) attributes {dimension_semantics = [#tpu.dimension_semantics<parallel>, #tpu.dimension_semantics<arbitrary>], iteration_bounds = array<i64: 1, 1>, scalar_prefetch = 0 : i64, scratch_operands = 0 : i64, tpu.core_type = #tpu.core_type<tc>, window_params = [{transform_indices = @transform_0, window_bounds = array<i64: 8, 120>}, {transform_indices = @transform_1, window_bounds = array<i64: 8, 120>}, {transform_indices = @transform_2, window_bounds = array<i64: 8, 120>}, {transform_indices = @transform_3, window_bounds = array<i64: 8, 120>}, {transform_indices = @transform_4, window_bounds = array<i64: 8, 120>}, {transform_indices = @transform_5, window_bounds = array<i64: 8, 120>}]} {
    %c0_i32 = arith.constant 0 : i32
    %0 = arith.cmpi eq, %arg1, %c0_i32 : i32
    %1 = arith.extui %0 : i1 to i32
    %c0_i32_0 = arith.constant 0 : i32
    %2 = arith.cmpi ne, %1, %c0_i32_0 : i32
    scf.if %2 {
      %cst_21 = arith.constant 0.000000e+00 : f32
      %35 = vector.broadcast %cst_21 : f32 to vector<8x120xf32>
      %c0_22 = arith.constant 0 : index
      %c0_23 = arith.constant 0 : index
      %36 = vector.load %arg4[%c0_22, %c0_23] : memref<8x120xf32, #tpu.memory_space<vmem>>, vector<8x120xf32>
      tpu.vector_store %arg4[%c0_22, %c0_23], %35 {strides = array<i32>} : memref<8x120xf32, #tpu.memory_space<vmem>>, vector<8x120xf32>,
      %cst_24 = arith.constant 0.000000e+00 : f32
      %37 = vector.broadcast %cst_24 : f32 to vector<8x120xf32>
      %c0_25 = arith.constant 0 : index
      %c0_26 = arith.constant 0 : index
      %38 = vector.load %arg5[%c0_25, %c0_26] : memref<8x120xf32, #tpu.memory_space<vmem>>, vector<8x120xf32>
      tpu.vector_store %arg5[%c0_25, %c0_26], %37 {strides = array<i32>} : memref<8x120xf32, #tpu.memory_space<vmem>>, vector<8x120xf32>,
      %cst_27 = arith.constant 0.000000e+00 : f32
      %39 = vector.broadcast %cst_27 : f32 to vector<8x120xf32>
      %c0_28 = arith.constant 0 : index
      %c0_29 = arith.constant 0 : index
      %40 = vector.load %arg6[%c0_28, %c0_29] : memref<8x120xf32, #tpu.memory_space<vmem>>, vector<8x120xf32>
      tpu.vector_store %arg6[%c0_28, %c0_29], %39 {strides = array<i32>} : memref<8x120xf32, #tpu.memory_space<vmem>>, vector<8x120xf32>,
      %cst_30 = arith.constant 0.000000e+00 : f32
      %41 = vector.broadcast %cst_30 : f32 to vector<8x120xf32>
      %c0_31 = arith.constant 0 : index
      %c0_32 = arith.constant 0 : index
      %42 = vector.load %arg7[%c0_31, %c0_32] : memref<8x120xf32, #tpu.memory_space<vmem>>, vector<8x120xf32>
      tpu.vector_store %arg7[%c0_31, %c0_32], %41 {strides = array<i32>} : memref<8x120xf32, #tpu.memory_space<vmem>>, vector<8x120xf32>,
    } else {
    }
    %c0 = arith.constant 0 : index
    %c0_1 = arith.constant 0 : index
    %3 = vector.load %arg2[%c0, %c0_1] : memref<8x120xf32, #tpu.memory_space<vmem>>, vector<8x120xf32>
    %c0_2 = arith.constant 0 : index
    %c0_3 = arith.constant 0 : index
    %4 = vector.load %arg3[%c0_2, %c0_3] : memref<8x120xf32, #tpu.memory_space<vmem>>, vector<8x120xf32>
    %5 = tpu.iota {dimensions = array<i32: 0>} : vector<8x1xi32>
    %c8_i32 = arith.constant 8 : i32
    %6 = arith.muli %arg1, %c8_i32 : i32
    %7 = vector.broadcast %6 : i32 to vector<8x1xi32>
    %8 = arith.addi %5, %7 : vector<8x1xi32>
    %c2_i32 = arith.constant 2 : i32
    %9 = vector.broadcast %c2_i32 : i32 to vector<8x1xi32>
    %10 = arith.cmpi slt, %8, %9 : vector<8x1xi32>
    %11 = arith.cmpf oeq, %4, %4 : vector<8x120xf32>
    %12 = vector.broadcast %10 : vector<8x1xi1> to vector<8x120xi1>
    %13 = arith.andi %12, %11 : vector<8x120xi1>
    %14 = arith.extui %13 : vector<8x120xi1> to vector<8x120xi32>
    %15 = arith.sitofp %14 : vector<8x120xi32> to vector<8x120xf32>
    %c0_4 = arith.constant 0 : index
    %c0_5 = arith.constant 0 : index
    %16 = vector.load %arg4[%c0_4, %c0_5] : memref<8x120xf32, #tpu.memory_space<vmem>>, vector<8x120xf32>
    %17 = arith.addf %16, %15 : vector<8x120xf32>
    %c0_6 = arith.constant 0 : index
    %c0_7 = arith.constant 0 : index
    %18 = vector.load %arg4[%c0_6, %c0_7] : memref<8x120xf32, #tpu.memory_space<vmem>>, vector<8x120xf32>
    tpu.vector_store %arg4[%c0_6, %c0_7], %17 {strides = array<i32>} : memref<8x120xf32, #tpu.memory_space<vmem>>, vector<8x120xf32>,
    %cst = arith.constant 0.000000e+00 : f32
    %19 = vector.broadcast %cst : f32 to vector<8x120xf32>
    %20 = arith.select %13, %4, %19 : vector<8x120xi1>, vector<8x120xf32>
    %c0_8 = arith.constant 0 : index
    %c0_9 = arith.constant 0 : index
    %21 = vector.load %arg5[%c0_8, %c0_9] : memref<8x120xf32, #tpu.memory_space<vmem>>, vector<8x120xf32>
    %22 = arith.addf %21, %20 : vector<8x120xf32>
    %c0_10 = arith.constant 0 : index
    %c0_11 = arith.constant 0 : index
    %23 = vector.load %arg5[%c0_10, %c0_11] : memref<8x120xf32, #tpu.memory_space<vmem>>, vector<8x120xf32>
    tpu.vector_store %arg5[%c0_10, %c0_11], %22 {strides = array<i32>} : memref<8x120xf32, #tpu.memory_space<vmem>>, vector<8x120xf32>,
    %c0_12 = arith.constant 0 : index
    %c0_13 = arith.constant 0 : index
    %24 = vector.load %arg6[%c0_12, %c0_13] : memref<8x120xf32, #tpu.memory_space<vmem>>, vector<8x120xf32>
    %25 = arith.mulf %20, %20 : vector<8x120xf32>
    %26 = arith.addf %24, %25 : vector<8x120xf32>
    %c0_14 = arith.constant 0 : index
    %c0_15 = arith.constant 0 : index
    %27 = vector.load %arg6[%c0_14, %c0_15] : memref<8x120xf32, #tpu.memory_space<vmem>>, vector<8x120xf32>
    tpu.vector_store %arg6[%c0_14, %c0_15], %26 {strides = array<i32>} : memref<8x120xf32, #tpu.memory_space<vmem>>, vector<8x120xf32>,
    %28 = arith.subf %4, %3 : vector<8x120xf32>
    %cst_16 = arith.constant 0.000000e+00 : f32
    %29 = vector.broadcast %cst_16 : f32 to vector<8x120xf32>
    %30 = arith.select %13, %28, %29 : vector<8x120xi1>, vector<8x120xf32>
    %c0_17 = arith.constant 0 : index
    %c0_18 = arith.constant 0 : index
    %31 = vector.load %arg7[%c0_17, %c0_18] : memref<8x120xf32, #tpu.memory_space<vmem>>, vector<8x120xf32>
    %32 = arith.mulf %30, %30 : vector<8x120xf32>
    %33 = arith.addf %31, %32 : vector<8x120xf32>
    %c0_19 = arith.constant 0 : index
    %c0_20 = arith.constant 0 : index
    %34 = vector.load %arg7[%c0_19, %c0_20] : memref<8x120xf32, #tpu.memory_space<vmem>>, vector<8x120xf32>
    tpu.vector_store %arg7[%c0_19, %c0_20], %33 {strides = array<i32>} : memref<8x120xf32, #tpu.memory_space<vmem>>, vector<8x120xf32>,
    return
  }
  func.func @transform_0(%arg0: i32, %arg1: i32) -> (i32, i32) {
    %c0_i32 = arith.constant 0 : i32
    return %arg1, %arg0 : i32, i32
  }
  func.func @transform_1(%arg0: i32, %arg1: i32) -> (i32, i32) {
    %c0_i32 = arith.constant 0 : i32
    return %arg1, %arg0 : i32, i32
  }
  func.func @transform_2(%arg0: i32, %arg1: i32) -> (i32, i32) {
    %c0_i32 = arith.constant 0 : i32
    %c0_i32_0 = arith.constant 0 : i32
    return %c0_i32, %arg0 : i32, i32
  }
  func.func @transform_3(%arg0: i32, %arg1: i32) -> (i32, i32) {
    %c0_i32 = arith.constant 0 : i32
    %c0_i32_0 = arith.constant 0 : i32
    return %c0_i32, %arg0 : i32, i32
  }
  func.func @transform_4(%arg0: i32, %arg1: i32) -> (i32, i32) {
    %c0_i32 = arith.constant 0 : i32
    %c0_i32_0 = arith.constant 0 : i32
    return %c0_i32, %arg0 : i32, i32
  }
  func.func @transform_5(%arg0: i32, %arg1: i32) -> (i32, i32) {
    %c0_i32 = arith.constant 0 : i32
    %c0_i32_0 = arith.constant 0 : i32
    return %c0_i32, %arg0 : i32, i32
  }
}

</mosaic_0001>

<llo_original>
// kernel: tpu_custom_call.1
$region0: #{tpu_custom_call.1}
  #allocation0 [shape = 'u32[]', space=smem, size = 0x4, offset = 0x4, fixed_abs, tag = 'smem constant byte address 0x4 - core index']
  #allocation1 [shape = 'u32[72,128]{1,0:T(1,128)}', space=vmem, size = 0x9000, scoped, tag = 'internal scratch']
  %s0 = inlined_call_operand.hbm [shape: f32[2,120], index: 0, kind: input, shape index: {}]
  %s1 = inlined_call_operand.hbm [shape: f32[2,120], index: 1, kind: input, shape index: {}]
  %s2 = inlined_call_operand.hbm [shape: f32[8,120], index: 2, kind: output, shape index: {0}]
  %s3 = inlined_call_operand.hbm [shape: f32[8,120], index: 3, kind: output, shape index: {1}]
  %s4 = inlined_call_operand.hbm [shape: f32[8,120], index: 4, kind: output, shape index: {2}]
  %s5 = inlined_call_operand.hbm [shape: f32[8,120], index: 5, kind: output, shape index: {3}]
  %6 = xla_tuple %s2, %s3, %s4, %s5
  %s7 = sld [smem:[#allocation0]]
  $region54: #{tpu_custom_call.1} parent=0
    _
  %s9 = ssub.s32 1, %s7
  %s10 = scalar_select 0, %s9, %s7
  $region1: #{tpu_custom_call.1} parent=0
    #allocation2 [shape = 'u8[4096]{0}', space=vmem, size = 0x1000, scoped, tag = 'input window, operand 0, single buffered']
    #allocation3 [shape = 's32[1]{0}', space=sflag, size = 0x4, scoped, tag = 'scoped memory for tpu_custom_call.1']
    #allocation4 [shape = 's32[1]{0}', space=sflag, size = 0x4, scoped, tag = 'scoped memory for tpu_custom_call.1']
    #allocation5 [shape = 'u8[4096]{0}', space=vmem, size = 0x1000, scoped, tag = 'input window, operand 1, single buffered']
    #allocation6 [shape = 's32[1]{0}', space=sflag, size = 0x4, scoped, tag = 'scoped memory for tpu_custom_call.1']
    #allocation7 [shape = 'u8[4096]{0}', space=vmem, size = 0x1000, scoped, tag = 'output window, operand 0, single buffered']
    #allocation8 [shape = 'u8[4096]{0}', space=vmem, size = 0x1000, scoped, tag = 'output window, operand 1, single buffered']
    #allocation9 [shape = 's32[1]{0}', space=sflag, size = 0x4, scoped, tag = 'scoped memory for tpu_custom_call.1']
    #allocation10 [shape = 'u8[4096]{0}', space=vmem, size = 0x1000, scoped, tag = 'output window, operand 2, single buffered']
    #allocation11 [shape = 'u8[4096]{0}', space=vmem, size = 0x1000, scoped, tag = 'output window, operand 3, single buffered']
    #allocation12 [shape = 's32[1]{0}', space=sflag, size = 0x4, scoped, tag = 'scoped memory for tpu_custom_call.1']
    %11 = vsyncpa [#allocation3], 0
    %12 = vsyncpa [#allocation6], 0
    %13 = vsyncpa [#allocation4], 0
    %14 = vsyncpa [#allocation9], 0
    %15 = vsyncpa [#allocation12], 0
    // Predicated region
    $region2: #{tpu_custom_call.1} parent=1 // pred_check
      _
    $region3: #{tpu_custom_call.1} parent=1 // pred_check_branch
      %17 = sbr.rel (0) target = $region5
    $region4: #{tpu_custom_call.1} parent=1 // pred_region
      %19 = vsyncadd [#allocation3], 96
      %s20 = sshll.u32 %s0, 4
      %s21 = int_to_ptr.hbm [resolvable:$true] %s20
      %s22 = sshll.u32 [#allocation2], 4
      %s23 = int_to_ptr.vmem [resolvable:$true] %s22
      %28 = dma.hbm_to_vmem [thread:$0]  %s21, 32, %s23, [#allocation3], 32, 32, 2
    $region5: #{tpu_custom_call.1} parent=1 // pred_fallthru
      _
    // Predicated region
    $region6: #{tpu_custom_call.1} parent=1 // pred_check
      _
    $region7: #{tpu_custom_call.1} parent=1 // pred_check_branch
      %30 = sbr.rel (0) target = $region9
    $region8: #{tpu_custom_call.1} parent=1 // pred_region
      %32 = vsyncadd [#allocation6], 96
      %s33 = sshll.u32 %s1, 4
      %s34 = int_to_ptr.hbm [resolvable:$true] %s33
      %s35 = sshll.u32 [#allocation5], 4
      %s36 = int_to_ptr.vmem [resolvable:$true] %s35
      %41 = dma.hbm_to_vmem [thread:$0]  %s34, 32, %s36, [#allocation6], 32, 32, 2
    $region9: #{tpu_custom_call.1} parent=1 // pred_fallthru
      _
    // Predicated region
    $region10: #{tpu_custom_call.1} parent=1 // pred_check
      _
    $region11: #{tpu_custom_call.1} parent=1 // pred_check_branch
      %43 = sbr.rel (0) target = $region13
    $region12: #{tpu_custom_call.1} parent=1 // pred_region
      %45 = dma.done [#allocation3], 128
    $region13: #{tpu_custom_call.1} parent=1 // pred_fallthru
      _
    // Predicated region
    $region14: #{tpu_custom_call.1} parent=1 // pred_check
      _
    $region15: #{tpu_custom_call.1} parent=1 // pred_check_branch
      %47 = sbr.rel (0) target = $region17
    $region16: #{tpu_custom_call.1} parent=1 // pred_region
      %49 = dma.done [#allocation6], 128
    $region17: #{tpu_custom_call.1} parent=1 // pred_fallthru
      _
    %p50 = scmp.eq.s32.totalorder 0, 0
    // Predicated region
    $region18: #{tpu_custom_call.1} parent=1 // pred_check
      %p51 = pneg %p50
    $region19: #{tpu_custom_call.1} parent=1 // pred_check_branch
      %53 = sbr.rel (%p51) target = $region21
    $region20: #{tpu_custom_call.1} parent=1 // pred_region
      %vm54 = vcmask 982016
      %55 = vst.msk [vmem:[#allocation7] sm:$0xff] %vm54, 0.0
      %56 = vst.msk [vmem:[#allocation8] sm:$0xff] %vm54, 0.0
      %57 = vst.msk [vmem:[#allocation10] sm:$0xff] %vm54, 0.0
      %58 = vst.msk [vmem:[#allocation11] sm:$0xff] %vm54, 0.0
    $region21: #{tpu_custom_call.1} parent=1 // pred_fallthru
      _
    %v59 = vld [vmem:[#allocation2] sm:$0xff]
    %v60 = vld [vmem:[#allocation5] sm:$0xff]
    %v61 = vlaneseq
    %v62 = vshrl.u32 %v61, 7
    %s63 = smul.u32 0, 8
    %v64 = vstv %s63
    %v65 = vadd.s32 %v62, %v64
    %vm66 = vcmp.lt.s32.totalorder %v65, 2
    %vm67 = vcmp.eq.f32.partialorder %v60, %v60
    %v68 = vsel %vm66, 1, 0
    %vm69 = vcmp.eq.s32.totalorder %v68, 1
    %vm70 = vmand %vm69, %vm67
    %v71 = vsel %vm70, 1, 0
    %v72 = vcvt.s32.f32 %v71
    %v73 = vld [vmem:[#allocation7] sm:$0xff]
    %v74 = vadd.f32 %v73, %v72
    %vm75 = vcmask 982016
    %76 = vst.msk [vmem:[#allocation7] sm:$0xff] %vm75, %v74
    %v77 = vsel %vm70, %v60, 0.0
    %v78 = vld [vmem:[#allocation8] sm:$0xff]
    %v79 = vadd.f32 %v78, %v77
    %80 = vst.msk [vmem:[#allocation8] sm:$0xff] %vm75, %v79
    %v81 = vld [vmem:[#allocation10] sm:$0xff]
    %v82 = vmul.f32 %v77, %v77
    %v83 = vadd.f32 %v81, %v82
    %84 = vst.msk [vmem:[#allocation10] sm:$0xff] %vm75, %v83
    %v85 = vsub.f32 %v60, %v59
    %v86 = vsel %vm70, %v85, 0.0
    %v87 = vld [vmem:[#allocation11] sm:$0xff]
    %v88 = vmul.f32 %v86, %v86
    %v89 = vadd.f32 %v87, %v88
    %90 = vst.msk [vmem:[#allocation11] sm:$0xff] %vm75, %v89
    // Predicated region
    $region22: #{tpu_custom_call.1} parent=1 // pred_check
      _
    $region23: #{tpu_custom_call.1} parent=1 // pred_check_branch
      %92 = sbr.rel (0) target = $region25
    $region24: #{tpu_custom_call.1} parent=1 // pred_region
      %94 = vsyncadd [#allocation4], 0
      %s96 = sshll.u32 [#allocation7], 4
      %s97 = int_to_ptr.vmem [resolvable:$true] %s96
      %s98 = sshll.u32 %s2, 4
      %s99 = int_to_ptr.hbm [resolvable:$true] %s98
      %101 = dma.vmem_to_hbm [thread:$0]  %s97, 128, %s99, [#allocation4]
    $region25: #{tpu_custom_call.1} parent=1 // pred_fallthru
      _
    // Predicated region
    $region26: #{tpu_custom_call.1} parent=1 // pred_check
      _
    $region27: #{tpu_custom_call.1} parent=1 // pred_check_branch
      %103 = sbr.rel (0) target = $region29
    $region28: #{tpu_custom_call.1} parent=1 // pred_region
      %105 = vsyncadd [#allocation9], 0
      %s107 = sshll.u32 [#allocation8], 4
      %s108 = int_to_ptr.vmem [resolvable:$true] %s107
      %s109 = sshll.u32 %s3, 4
      %s110 = int_to_ptr.hbm [resolvable:$true] %s109
      %112 = dma.vmem_to_hbm [thread:$0]  %s108, 128, %s110, [#allocation9]
    $region29: #{tpu_custom_call.1} parent=1 // pred_fallthru
      _
    // Predicated region
    $region30: #{tpu_custom_call.1} parent=1 // pred_check
      _
    $region31: #{tpu_custom_call.1} parent=1 // pred_check_branch
      %114 = sbr.rel (0) target = $region33
    $region32: #{tpu_custom_call.1} parent=1 // pred_region
      %116 = vsyncadd [#allocation9], 0
      %s118 = sshll.u32 [#allocation10], 4
      %s119 = int_to_ptr.vmem [resolvable:$true] %s118
      %s120 = sshll.u32 %s4, 4
      %s121 = int_to_ptr.hbm [resolvable:$true] %s120
      %123 = dma.vmem_to_hbm [thread:$0]  %s119, 128, %s121, [#allocation9]
    $region33: #{tpu_custom_call.1} parent=1 // pred_fallthru
      _
    // Predicated region
    $region34: #{tpu_custom_call.1} parent=1 // pred_check
      _
    $region35: #{tpu_custom_call.1} parent=1 // pred_check_branch
      %125 = sbr.rel (0) target = $region37
    $region36: #{tpu_custom_call.1} parent=1 // pred_region
      %127 = vsyncadd [#allocation12], 0
      %s129 = sshll.u32 [#allocation11], 4
      %s130 = int_to_ptr.vmem [resolvable:$true] %s129
      %s131 = sshll.u32 %s5, 4
      %s132 = int_to_ptr.hbm [resolvable:$true] %s131
      %134 = dma.vmem_to_hbm [thread:$0]  %s130, 128, %s132, [#allocation12]
    $region37: #{tpu_custom_call.1} parent=1 // pred_fallthru
      _
    // Predicated region
    $region38: #{tpu_custom_call.1} parent=1 // pred_check
      _
    $region39: #{tpu_custom_call.1} parent=1 // pred_check_branch
      %136 = sbr.rel (0) target = $region41
    $region40: #{tpu_custom_call.1} parent=1 // pred_region
      %138 = dma.done [#allocation4], 128
    $region41: #{tpu_custom_call.1} parent=1 // pred_fallthru
      _
    // Predicated region
    $region42: #{tpu_custom_call.1} parent=1 // pred_check
      _
    $region43: #{tpu_custom_call.1} parent=1 // pred_check_branch
      %140 = sbr.rel (0) target = $region45
    $region44: #{tpu_custom_call.1} parent=1 // pred_region
      %142 = dma.done [#allocation9], 128
    $region45: #{tpu_custom_call.1} parent=1 // pred_fallthru
      _
    // Predicated region
    $region46: #{tpu_custom_call.1} parent=1 // pred_check
      _
    $region47: #{tpu_custom_call.1} parent=1 // pred_check_branch
      %144 = sbr.rel (0) target = $region49
    $region48: #{tpu_custom_call.1} parent=1 // pred_region
      %146 = dma.done [#allocation9], 128
    $region49: #{tpu_custom_call.1} parent=1 // pred_fallthru
      _
    // Predicated region
    $region50: #{tpu_custom_call.1} parent=1 // pred_check
      _
    $region51: #{tpu_custom_call.1} parent=1 // pred_check_branch
      %148 = sbr.rel (0) target = $region53
    $region52: #{tpu_custom_call.1} parent=1 // pred_region
      %150 = dma.done [#allocation12], 128
    $region53: #{tpu_custom_call.1} parent=1 // pred_fallthru
      _
    %151 = vsyncpa [#allocation3], 1
    %152 = vsyncpa [#allocation6], 1
    %153 = vsyncpa [#allocation4], 1
    %154 = vsyncpa [#allocation9], 1
    %155 = vsyncpa [#allocation12], 1

</llo_original>
